<compile_context>
chip_gen: v5e
topology: v5e:2x2
jax: 0.10.0
libtpu: 0.0.40
codegen_flags: <defaults>
</compile_context>

<pallas_src>
import functools

import jax
import jax.numpy as jnp
from jax.experimental import pallas as pl
from jax.experimental.pallas import tpu as pltpu


def _distill_kl_kernel(ys_ref, yt_ref, out_ref, *, inv_temp, batch, block_rows):
    tile = pl.program_id(0)
    inv_t = jnp.float32(inv_temp)

    ys = ys_ref[...].astype(jnp.float32) * inv_t
    yt = yt_ref[...].astype(jnp.float32) * inv_t

    # Per-row logsumexp of the student logits (numerically stable).
    ys_max = jnp.max(ys, axis=-1, keepdims=True)
    lse_s = ys_max + jnp.log(jnp.sum(jnp.exp(ys - ys_max), axis=-1, keepdims=True))

    # Per-row softmax + logsumexp of the teacher logits.
    yt_max = jnp.max(yt, axis=-1, keepdims=True)
    exp_t = jnp.exp(yt - yt_max)
    z_t = jnp.sum(exp_t, axis=-1, keepdims=True)
    lse_t = yt_max + jnp.log(z_t)
    p_t = exp_t * pl.reciprocal(z_t)  # exact (approx=False): keeps sum(p_t)==1

    # Row-constant fold (sum_c p_t == 1):
    #   sum_c p_t * ((yt - ys) + lse_s - lse_t)
    # = sum_c where(p_t > 0, p_t * (yt - ys), 0)  +  (lse_s - lse_t)
    # The where-guard keeps 0-target terms at exactly 0 (PyTorch convention) and
    # protects against 0 * (-inf) when teacher logits are masked.
    contrib = jnp.where(p_t > 0.0, p_t * (yt - ys), 0.0)
    row_kl = jnp.sum(contrib, axis=-1, keepdims=True) + (lse_s - lse_t)  # [TB,1]

    # Mask rows past the true batch size.  Applied AFTER the per-row reduction:
    # padded rows may contain arbitrary data (possibly NaN/Inf) and jnp.where
    # discards the unselected branch.
    row_ids = tile * block_rows + jax.lax.broadcasted_iota(
        jnp.int32, row_kl.shape, 0
    )
    row_kl = jnp.where(row_ids < batch, row_kl, 0.0)

    partial = jnp.sum(row_kl)
    # Lane-dense per-tile output; the wrapper reads [:, 0, 0] and reduces.
    out_ref[...] = jnp.full(out_ref.shape, partial, dtype=jnp.float32)


def _round_up(x: int, m: int) -> int:
    return ((x + m - 1) // m) * m


def _row_alignment(itemsize: int) -> int:
    # Packed sublane tile: 8 rows for f32, 16 for bf16, 32 for int8/fp8.
    return max(8, 32 // max(1, int(itemsize)))


def _per_row_vmem_bytes(C: int, itemsize: int) -> int:
    # 2 inputs x 2 pipeline buffers at the input dtype, plus ~5 tile-sized f32
    # in-kernel temporaries (ys, yt, exp_t, p_t, contrib).
    return 4 * C * itemsize + 5 * C * 4


def _choose_block_rows(B: int, C: int, itemsize: int) -> int:
    align = _row_alignment(itemsize)
    # Keep streaming buffers + f32 temporaries within ~24 MiB of scoped VMEM.
    target_bytes = 24 * 1024 * 1024
    tb = target_bytes // _per_row_vmem_bytes(C, itemsize)
    tb = max(align, (int(tb) // align) * align)
    # 1024-row tiles amortize the ~0.35us per-grid-step cost even at v7x's
    # ~3.2 TB/s HBM; larger tiles only add VMEM pressure.
    tb = min(tb, 1024)
    if tb >= B:
        if B <= align:
            return B  # single tiny block covering the whole (unpadded) batch
        # Guarantee >= 2 grid tiles so the "parallel" axis feeds both v7x TCs.
        tb = max(align, _round_up(pl.cdiv(B, 2), align))
        if tb >= B:
            return B
    return tb


def distill_kl(y_s: jax.Array, y_t: jax.Array, temperature: float,
               *, block_rows: int | None = None) -> jax.Array:
    """Computes DistillKL(T)(y_s, y_t). y_s, y_t: [B, C] logits."""
    assert y_s.shape == y_t.shape and y_s.ndim == 2
    B, C = y_s.shape
    itemsize = max(jnp.dtype(y_s.dtype).itemsize, jnp.dtype(y_t.dtype).itemsize)
    align = _row_alignment(itemsize)

    if block_rows is None:
        tb = _choose_block_rows(B, C, itemsize)
    else:
        tb = int(block_rows)
        if tb >= B:
            tb = B
        else:
            tb = max(align, (tb // align) * align)  # partial tiles must be aligned

    num_tiles = pl.cdiv(B, tb)

    # Explicit scoped-VMEM budget: pipelined input buffers + in-kernel f32
    # temporaries + output double-buffers + slack.  Capped at 48 MiB so there is
    # headroom inside v7x's 64 MiB per-TC VMEM (v5e/v6e have 128 MiB physical).
    vmem_needed = tb * _per_row_vmem_bytes(C, itemsize) + 2 * (8 * 128 * 4) + (1 << 20)
    vmem_limit = int(min(max(vmem_needed, 32 * 1024 * 1024), 48 * 1024 * 1024))

    kernel = functools.partial(
        _distill_kl_kernel,
        inv_temp=1.0 / float(temperature),
        batch=B,
        block_rows=tb,
    )

    cost = pl.CostEstimate(
        flops=int(12 * B * C),
        transcendentals=int(2 * B * C + 2 * B),
        bytes_accessed=int(2 * B * C * itemsize + num_tiles * 8 * 128 * 4),
    )

    partials = pl.pallas_call(
        kernel,
        out_shape=jax.ShapeDtypeStruct((num_tiles, 8, 128), jnp.float32),
        grid_spec=pltpu.PrefetchScalarGridSpec(
            num_scalar_prefetch=0,
            grid=(num_tiles,),
            in_specs=[
                pl.BlockSpec((tb, C), lambda i: (i, 0)),
                pl.BlockSpec((tb, C), lambda i: (i, 0)),
            ],
            out_specs=pl.BlockSpec((1, 8, 128), lambda i: (i, 0, 0)),
        ),
        compiler_params=pltpu.CompilerParams(
            dimension_semantics=("parallel",),  # independent tiles -> both TCs on v7x
            vmem_limit_bytes=vmem_limit,
        ),
        cost_estimate=cost,
    )(y_s, y_t)

    T = jnp.float32(temperature)
    kl_sum = jnp.sum(partials[:, 0, 0])
    return kl_sum * (T * T) / jnp.float32(B)


def _reference_distill_kl(y_s, y_t, temperature):
    # Pure-JAX reference for sanity checking.
    T = float(temperature)
    log_p_s = jax.nn.log_softmax(y_s.astype(jnp.float32) / T, axis=1)
    p_t = jax.nn.softmax(y_t.astype(jnp.float32) / T, axis=1)
    log_p_t = jax.nn.log_softmax(y_t.astype(jnp.float32) / T, axis=1)
    kl = jnp.sum(p_t * (log_p_t - log_p_s))
    return kl * (T ** 2) / y_s.shape[0]


if __name__ == "__main__":
    key = jax.random.PRNGKey(0)
    k1, k2, k3, k4, k5, k6 = jax.random.split(key, 6)

    T = 4.0

    # Case 1: explicit tile size -> 4 parallel batch tiles of 16 rows.
    B, C = 64, 32
    y_s = jax.random.normal(k1, (B, C), dtype=jnp.float32)
    y_t = jax.random.normal(k2, (B, C), dtype=jnp.float32)
    loss = distill_kl(y_s, y_t, T, block_rows=16)
    jax.block_until_ready(loss)
    ref = _reference_distill_kl(y_s, y_t, T)
    assert jnp.allclose(loss, ref, rtol=1e-5, atol=1e-6), (loss, ref)

    # Case 2: auto tile size, batch not a multiple of 8 -> split into 2 tiles
    # (rows 8..9 live in a partial second tile; padded rows are masked).
    B2, C2 = 10, 32
    y_s2 = jax.random.normal(k3, (B2, C2), dtype=jnp.float32)
    y_t2 = jax.random.normal(k4, (B2, C2), dtype=jnp.float32)
    loss2 = distill_kl(y_s2, y_t2, T)
    jax.block_until_ready(loss2)
    ref2 = _reference_distill_kl(y_s2, y_t2, T)
    assert jnp.allclose(loss2, ref2, rtol=1e-5, atol=1e-6), (loss2, ref2)

    # Case 3: bf16 logits (half the HBM traffic), 16-row-aligned tiles, last
    # tile partial.
    B3, C3 = 24, 128
    y_s3 = jax.random.normal(k5, (B3, C3), dtype=jnp.float32).astype(jnp.bfloat16)
    y_t3 = jax.random.normal(k6, (B3, C3), dtype=jnp.float32).astype(jnp.bfloat16)
    loss3 = distill_kl(y_s3, y_t3, T)
    jax.block_until_ready(loss3)
    ref3 = _reference_distill_kl(y_s3, y_t3, T)
    assert jnp.allclose(loss3, ref3, rtol=1e-4, atol=1e-5), (loss3, ref3)

    print("KERNEL_OK")
</pallas_src>

<mosaic_0001>
module attributes {stable_mosaic.version = 11 : i64} {
  func.func @_distill_kl_kernel(%arg0: i32, %arg1: memref<16x32xf32, #tpu.memory_space<vmem>>, %arg2: memref<16x32xf32, #tpu.memory_space<vmem>>, %arg3: memref<1x8x128xf32, #tpu.memory_space<vmem>>) attributes {dimension_semantics = [#tpu.dimension_semantics<parallel>], iteration_bounds = array<i64: 4>, scalar_prefetch = 0 : i64, scratch_operands = 0 : i64, tpu.core_type = #tpu.core_type<tc>, window_params = [{transform_indices = @transform_0, window_bounds = array<i64: 16, 32>}, {transform_indices = @transform_1, window_bounds = array<i64: 16, 32>}, {transform_indices = @transform_2, window_bounds = array<i64: 1, 8, 128>}]} {
    %c0 = arith.constant 0 : index
    %c0_0 = arith.constant 0 : index
    %0 = vector.load %arg1[%c0, %c0_0] : memref<16x32xf32, #tpu.memory_space<vmem>>, vector<16x32xf32>
    %cst = arith.constant 2.500000e-01 : f32
    %1 = vector.broadcast %cst : f32 to vector<16x32xf32>
    %2 = arith.mulf %0, %1 : vector<16x32xf32>
    %c0_1 = arith.constant 0 : index
    %c0_2 = arith.constant 0 : index
    %3 = vector.load %arg2[%c0_1, %c0_2] : memref<16x32xf32, #tpu.memory_space<vmem>>, vector<16x32xf32>
    %cst_3 = arith.constant 2.500000e-01 : f32
    %4 = vector.broadcast %cst_3 : f32 to vector<16x32xf32>
    %5 = arith.mulf %3, %4 : vector<16x32xf32>
    %cst_4 = arith.constant dense<0xFF800000> : vector<16xf32>
    %6 = vector.multi_reduction <maximumf>, %2, %cst_4 [1] : vector<16x32xf32> to vector<16xf32>
    %7 = vector.shape_cast %6 : vector<16xf32> to vector<16x1xf32>
    %8 = vector.broadcast %7 : vector<16x1xf32> to vector<16x32xf32>
    %9 = arith.subf %2, %8 : vector<16x32xf32>
    %10 = math.exp %9 : vector<16x32xf32>
    %cst_5 = arith.constant dense<0.000000e+00> : vector<16xf32>
    %11 = vector.multi_reduction <add>, %10, %cst_5 [1] : vector<16x32xf32> to vector<16xf32>
    %12 = vector.shape_cast %11 : vector<16xf32> to vector<16x1xf32>
    %13 = math.log %12 : vector<16x1xf32>
    %14 = arith.addf %7, %13 : vector<16x1xf32>
    %cst_6 = arith.constant dense<0xFF800000> : vector<16xf32>
    %15 = vector.multi_reduction <maximumf>, %5, %cst_6 [1] : vector<16x32xf32> to vector<16xf32>
    %16 = vector.shape_cast %15 : vector<16xf32> to vector<16x1xf32>
    %17 = vector.broadcast %16 : vector<16x1xf32> to vector<16x32xf32>
    %18 = arith.subf %5, %17 : vector<16x32xf32>
    %19 = math.exp %18 : vector<16x32xf32>
    %cst_7 = arith.constant dense<0.000000e+00> : vector<16xf32>
    %20 = vector.multi_reduction <add>, %19, %cst_7 [1] : vector<16x32xf32> to vector<16xf32>
    %21 = vector.shape_cast %20 : vector<16xf32> to vector<16x1xf32>
    %22 = math.log %21 : vector<16x1xf32>
    %23 = arith.addf %16, %22 : vector<16x1xf32>
    %24 = tpu.reciprocal %21 : vector<16x1xf32> -> vector<16x1xf32>
    %25 = vector.broadcast %24 : vector<16x1xf32> to vector<16x32xf32>
    %26 = arith.mulf %19, %25 : vector<16x32xf32>
    %cst_8 = arith.constant 0.000000e+00 : f32
    %27 = vector.broadcast %cst_8 : f32 to vector<16x32xf32>
    %28 = arith.cmpf ogt, %26, %27 : vector<16x32xf32>
    %29 = arith.subf %5, %2 : vector<16x32xf32>
    %30 = arith.mulf %26, %29 : vector<16x32xf32>
    %cst_9 = arith.constant 0.000000e+00 : f32
    %31 = vector.broadcast %cst_9 : f32 to vector<16x32xf32>
    %32 = arith.select %28, %30, %31 : vector<16x32xi1>, vector<16x32xf32>
    %cst_10 = arith.constant dense<0.000000e+00> : vector<16xf32>
    %33 = vector.multi_reduction <add>, %32, %cst_10 [1] : vector<16x32xf32> to vector<16xf32>
    %34 = vector.shape_cast %33 : vector<16xf32> to vector<16x1xf32>
    %35 = arith.subf %14, %23 : vector<16x1xf32>
    %36 = arith.addf %34, %35 : vector<16x1xf32>
    %c16_i32 = arith.constant 16 : i32
    %37 = arith.muli %arg0, %c16_i32 : i32
    %38 = tpu.iota {dimensions = array<i32: 0>} : vector<16x1xi32>
    %39 = vector.broadcast %37 : i32 to vector<16x1xi32>
    %40 = arith.addi %39, %38 : vector<16x1xi32>
    %c64_i32 = arith.constant 64 : i32
    %41 = vector.broadcast %c64_i32 : i32 to vector<16x1xi32>
    %42 = arith.cmpi slt, %40, %41 : vector<16x1xi32>
    %cst_11 = arith.constant 0.000000e+00 : f32
    %43 = vector.broadcast %cst_11 : f32 to vector<16x1xf32>
    %44 = arith.select %42, %36, %43 : vector<16x1xi1>, vector<16x1xf32>
    %45 = vector.shape_cast %44 : vector<16x1xf32> to vector<1x16x1xf32>
    %cst_12 = arith.constant dense<0.000000e+00> : vector<1xf32>
    %46 = vector.multi_reduction <add>, %45, %cst_12 [1, 2] : vector<1x16x1xf32> to vector<1xf32>
    %47 = vector.shape_cast %46 : vector<1xf32> to vector<1x1x1xf32>
    %48 = vector.extract %47[0, 0, 0] : f32 from vector<1x1x1xf32>
    %49 = vector.broadcast %48 : f32 to vector<1x8x128xf32>
    %c0_13 = arith.constant 0 : index
    %c0_14 = arith.constant 0 : index
    %c0_15 = arith.constant 0 : index
    %50 = vector.load %arg3[%c0_13, %c0_14, %c0_15] : memref<1x8x128xf32, #tpu.memory_space<vmem>>, vector<1x8x128xf32>
    tpu.vector_store %arg3[%c0_13, %c0_14, %c0_15], %49 {strides = array<i32>} : memref<1x8x128xf32, #tpu.memory_space<vmem>>, vector<1x8x128xf32>,
    return
  }
  func.func @transform_0(%arg0: i32) -> (i32, i32) {
    %c0_i32 = arith.constant 0 : i32
    %c0_i32_0 = arith.constant 0 : i32
    return %arg0, %c0_i32 : i32, i32
  }
  func.func @transform_1(%arg0: i32) -> (i32, i32) {
    %c0_i32 = arith.constant 0 : i32
    %c0_i32_0 = arith.constant 0 : i32
    return %arg0, %c0_i32 : i32, i32
  }
  func.func @transform_2(%arg0: i32) -> (i32, i32, i32) {
    %c0_i32 = arith.constant 0 : i32
    %c0_i32_0 = arith.constant 0 : i32
    %c0_i32_1 = arith.constant 0 : i32
    return %arg0, %c0_i32, %c0_i32_0 : i32, i32, i32
  }
}

</mosaic_0001>

<llo_original>
// kernel: tpu_custom_call.1
$region0: #{tpu_custom_call.1}
  #allocation0 [shape = 'u32[]', space=smem, size = 0x4, offset = 0x4, fixed_abs, tag = 'smem constant byte address 0x4 - core index']
  #allocation1 [shape = 'u32[72,128]{1,0:T(1,128)}', space=vmem, size = 0x9000, scoped, tag = 'internal scratch']
  %s0 = inlined_call_operand.vmem [shape: f32[64,32], index: 0, kind: input, shape index: {}]
  %s1 = inlined_call_operand.vmem [shape: f32[64,32], index: 1, kind: input, shape index: {}]
  %s2 = inlined_call_operand.hbm [shape: f32[4,8,128], index: 2, kind: output, shape index: {}]
  %s3 = sld [smem:[#allocation0]]
  $region41: #{tpu_custom_call.1} parent=0
    _
  %s5 = ssub.s32 1, %s3
  %s6 = scalar_select 0, %s5, %s3
  $region1: #{tpu_custom_call.1} parent=0
    #allocation2 [shape = 'u8[8192]{0}', space=vmem, size = 0x2000, scoped, tag = 'output window, operand 0']
    #allocation3 [shape = 's32[2]{0}', space=sflag, size = 0x8, scoped, tag = 'scoped memory for tpu_custom_call.1']
    %7 = vsyncpa [#allocation3], 0
    %s8 = scalar_lea.sflag [#allocation3], 1
    %9 = vsyncpa %s8, 0
    loop: start=0, step=1, limit=6
    $region2: #{tpu_custom_call.1} parent=1 // loop_pre_header
      _
    $region3: #{tpu_custom_call.1} parent=1 // loop_header
      %s11 = sphi 0, %s15
      %p12 = scmp.ge.s32.totalorder %s11, 6
      %s21 = sphi 0, %s23
      %s24 = sphi 0, %s21
      %s25 = sphi 0, %s24
      %s41 = sphi 0, %s25
      %s47 = sphi 0, %s49
      %s50 = sphi 0, %s47
      %s51 = sphi 0, %s50
      %s67 = sphi 0, %s51
      %s73 = sphi 0, %s75
      %s76 = sphi 0, %s73
      %s77 = sphi 0, %s76
      %s93 = sphi 0, %s77
    $region4: #{tpu_custom_call.1} parent=1 // loop_header_branch
      %14 = sbr.rel (%p12) target = $region8
    $region5: #{tpu_custom_call.1} parent=1 // loop_body
      %s16 = ssub.s32 %s11, 1
      %s17 = ssub.s32 %s11, 2
      %s18 = sadd.s32 %s11, 1
      %s19 = ssub.s32 %s11, %s18
      %p20 = scmp.eq.s32.totalorder %s19, 0
      %s22 = sadd.s32 %s21, 1
      %s23 = scalar_select %p20, %s21, %s22
      %p26 = pneg %p20
      %p27 = scmp.eq.s32.totalorder %s11, 3
      %p28 = por %p26, %p27
      %p29 = scmp.ne.s32.totalorder %s21, %s24
      %p30 = scmp.eq.s32.totalorder %s11, 0
      %p31 = por %p29, %p30
      %p32 = scmp.ne.s32.totalorder %s21, %s24
      %p33 = scmp.eq.s32.totalorder %s16, 3
      %p34 = por %p32, %p33
      %p35 = scmp.ne.s32.totalorder %s24, %s25
      %p36 = scmp.eq.s32.totalorder %s16, 0
      %p37 = por %p35, %p36
      %p38 = scmp.ne.s32.totalorder %s24, %s25
      %p39 = scmp.eq.s32.totalorder %s17, 3
      %p40 = por %p38, %p39
      %p42 = scmp.ne.s32.totalorder %s25, %s41
      %p43 = scmp.eq.s32.totalorder %s17, 0
      %p44 = por %p42, %p43
      %s45 = ssub.s32 %s11, %s18
      %p46 = scmp.eq.s32.totalorder %s45, 0
      %s48 = sadd.s32 %s47, 1
      %s49 = scalar_select %p46, %s47, %s48
      %p52 = pneg %p46
      %p53 = scmp.eq.s32.totalorder %s11, 3
      %p54 = por %p52, %p53
      %p55 = scmp.ne.s32.totalorder %s47, %s50
      %p56 = scmp.eq.s32.totalorder %s11, 0
      %p57 = por %p55, %p56
      %p58 = scmp.ne.s32.totalorder %s47, %s50
      %p59 = scmp.eq.s32.totalorder %s16, 3
      %p60 = por %p58, %p59
      %p61 = scmp.ne.s32.totalorder %s50, %s51
      %p62 = scmp.eq.s32.totalorder %s16, 0
      %p63 = por %p61, %p62
      %p64 = scmp.ne.s32.totalorder %s50, %s51
      %p65 = scmp.eq.s32.totalorder %s17, 3
      %p66 = por %p64, %p65
      %p68 = scmp.ne.s32.totalorder %s51, %s67
      %p69 = scmp.eq.s32.totalorder %s17, 0
      %p70 = por %p68, %p69
      %s71 = ssub.s32 %s11, %s18
      %p72 = scmp.eq.s32.totalorder %s71, 0
      %s74 = sadd.s32 %s73, 1
      %s75 = scalar_select %p72, %s73, %s74
      %p78 = pneg %p72
      %p79 = scmp.eq.s32.totalorder %s11, 3
      %p80 = por %p78, %p79
      %p81 = scmp.ne.s32.totalorder %s73, %s76
      %p82 = scmp.eq.s32.totalorder %s11, 0
      %p83 = por %p81, %p82
      %p84 = scmp.ne.s32.totalorder %s73, %s76
      %p85 = scmp.eq.s32.totalorder %s16, 3
      %p86 = por %p84, %p85
      %p87 = scmp.ne.s32.totalorder %s76, %s77
      %p88 = scmp.eq.s32.totalorder %s16, 0
      %p89 = por %p87, %p88
      %p90 = scmp.ne.s32.totalorder %s76, %s77
      %p91 = scmp.eq.s32.totalorder %s17, 3
      %p92 = por %p90, %p91
      %p94 = scmp.ne.s32.totalorder %s77, %s93
      %p95 = scmp.eq.s32.totalorder %s17, 0
      %p96 = por %p94, %p95
      %p97 = scmp.le.s32.totalorder 1, %s11
      %p98 = scmp.lt.s32.totalorder %s11, 5
      %p99 = pnand %p97, %p98
      %p100 = pneg %p99
      // Predicated region
      $region9: #{tpu_custom_call.1} parent=5 // pred_check
        _
      $region10: #{tpu_custom_call.1} parent=5 // pred_check_branch
        %102 = sbr.rel (%p99) target = $region12
      $region11: #{tpu_custom_call.1} parent=5 // pred_region
        %s103 = ssub.s32 %s11, 1
      $region12: #{tpu_custom_call.1} parent=5 // pred_fallthru
        _
      %p104 = scmp.lt.s32.totalorder %s11, 4
      // Predicated region
      $region13: #{tpu_custom_call.1} parent=5 // pred_check
        %p105 = pneg %p104
      $region14: #{tpu_custom_call.1} parent=5 // pred_check_branch
        %107 = sbr.rel (%p105) target = $region16
      $region15: #{tpu_custom_call.1} parent=5 // pred_region
        // Predicated region
        $region17: #{tpu_custom_call.1} parent=15 // pred_check
          %p108 = pneg %p31
        $region18: #{tpu_custom_call.1} parent=15 // pred_check_branch
          %110 = sbr.rel (%p108) target = $region20
        $region19: #{tpu_custom_call.1} parent=15 // pred_region
          %s111 = smul.u32 2, %s11
          %p112 = scmp.lt.s32.totalorder %s111, 7
          %s113 = scalar_select %p112, %s111, 7
          %s114 = smul.addr %s113, 8
          %s115 = scalar_lea.vmem %s0, %s114
          %s116 = smul.u32 2, %s11
        $region20: #{tpu_custom_call.1} parent=15 // pred_fallthru
          _
        // Predicated region
        $region21: #{tpu_custom_call.1} parent=15 // pred_check
          %p117 = pneg %p57
        $region22: #{tpu_custom_call.1} parent=15 // pred_check_branch
          %119 = sbr.rel (%p117) target = $region24
        $region23: #{tpu_custom_call.1} parent=15 // pred_region
          %s120 = smul.u32 2, %s11
          %p121 = scmp.lt.s32.totalorder %s120, 7
          %s122 = scalar_select %p121, %s120, 7
          %s123 = smul.addr %s122, 8
          %s124 = scalar_lea.vmem %s1, %s123
          %s125 = smul.u32 2, %s11
        $region24: #{tpu_custom_call.1} parent=15 // pred_fallthru
          _
      $region16: #{tpu_custom_call.1} parent=5 // pred_fallthru
        _
      %p126 = scmp.le.s32.totalorder 1, %s11
      %p127 = scmp.lt.s32.totalorder %s11, 5
      %p128 = pnand %p126, %p127
      %p129 = pneg %p128
      // Predicated region
      $region25: #{tpu_custom_call.1} parent=5 // pred_check
        _
      $region26: #{tpu_custom_call.1} parent=5 // pred_check_branch
        %131 = sbr.rel (%p128) target = $region28
      $region27: #{tpu_custom_call.1} parent=5 // pred_region
        %s132 = ssub.s32 %s11, 1
        %s133 = smul.u32 2, %s16
        %p134 = scmp.lt.s32.totalorder %s133, 7
        %s135 = scalar_select %p134, %s133, 7
        %s136 = smul.addr %s135, 8
        %s137 = scalar_lea.vmem %s0, %s136
        %p138 = pneg %p37
        %p139 = pneg %p34
        %s140 = smul.u32 2, %s16
        %p141 = scmp.lt.s32.totalorder %s140, 7
        %s142 = scalar_select %p141, %s140, 7
        %s143 = smul.addr %s142, 8
        %s144 = scalar_lea.vmem %s1, %s143
        %p145 = pneg %p63
        %p146 = pneg %p60
        %p147 = pneg %p89
        %p148 = pneg %p86
        %s149 = sand.u32 %s76, 1
        %s150 = scalar_lea.sflag [#allocation3], %s149
        %s151 = sand.u32 %s76, 1
        %s152 = smul.addr %s151, 8
        %s153 = scalar_lea.vmem [#allocation2], %s152
        %s154 = smul.u32 2, %s16
        %p155 = scmp.lt.s32.totalorder %s154, 7
        %s156 = scalar_select %p155, %s154, 7
        %s157 = smul.addr %s156, 8
        %s158 = scalar_lea.vmem %s0, %s157
        %s159 = smul.u32 2, %s16
        %s160 = smul.u32 2, %s16
        %p161 = scmp.lt.s32.totalorder %s160, 7
        %s162 = scalar_select %p161, %s160, 7
        %s163 = smul.addr %s162, 8
        %s164 = scalar_lea.vmem %s1, %s163
        %s165 = smul.u32 2, %s16
        %v166 = vld [vmem:[%s158] sm:$0xff]
        %v167 = vld [vmem:[%s158 + $0x8] sm:$0xff]
        %v168 = vmul.f32 %v166, 0.25
        %v169 = vmul.f32 %v167, 0.25
        %v170 = vld [vmem:[%s164] sm:$0xff]
        %v171 = vld [vmem:[%s164 + $0x8] sm:$0xff]
        %v172 = vmul.f32 %v170, 0.25
        %v173 = vmul.f32 %v171, 0.25
        %vm174 = vcmask 261120
        %v175 = vsel %vm174, %v168, -inf
        %176 = vmax.xlane.f32.xlu0 %v175
        %v177 = vpop.xlane.xlu0 %176
        %v178 = vsel %vm174, %v169, -inf
        %179 = vmax.xlane.f32.xlu0 %v178
        %v180 = vpop.xlane.xlu0 %179
        %v181 = vsub.f32 %v168, %v177
        %v182 = vsub.f32 %v169, %v180
        %v183 = vmul.f32 %v181, 1.442695
        %v184 = vpow.pop %v183
        %v185 = vmul.f32 %v182, 1.442695
        %v186 = vpow.pop %v185
        %v187 = vsel %vm174, %v184, 0.0
        %188 = vadd.xlane.f32.xlu0 %v187
        %v189 = vpop.xlane.xlu0 %188
        %v190 = vsel %vm174, %v186, 0.0
        %191 = vadd.xlane.f32.xlu0 %v190
        %v192 = vpop.xlane.xlu0 %191
        %v193 = vlog2.pop %v189
        %v194 = vmul.f32 %v193, 0.6931472
        %v195 = vlog2.pop %v192
        %v196 = vmul.f32 %v195, 0.6931472
        %v197 = vadd.f32 %v177, %v194
        %v198 = vadd.f32 %v180, %v196
        %v199 = vsel %vm174, %v172, -inf
        %200 = vmax.xlane.f32.xlu0 %v199
        %v201 = vpop.xlane.xlu0 %200
        %v202 = vsel %vm174, %v173, -inf
        %203 = vmax.xlane.f32.xlu0 %v202
        %v204 = vpop.xlane.xlu0 %203
        %v205 = vsub.f32 %v172, %v201
        %v206 = vsub.f32 %v173, %v204
        %v207 = vmul.f32 %v205, 1.442695
        %v208 = vpow.pop %v207
        %v209 = vmul.f32 %v206, 1.442695
        %v210 = vpow.pop %v209
        %v211 = vsel %vm174, %v208, 0.0
        %212 = vadd.xlane.f32.xlu0 %v211
        %v213 = vpop.xlane.xlu0 %212
        %v214 = vsel %vm174, %v210, 0.0
        %215 = vadd.xlane.f32.xlu0 %v214
        %v216 = vpop.xlane.xlu0 %215
        %v217 = vlog2.pop %v213
        %v218 = vmul.f32 %v217, 0.6931472
        %v219 = vlog2.pop %v216
        %v220 = vmul.f32 %v219, 0.6931472
        %v221 = vadd.f32 %v201, %v218
        %v222 = vadd.f32 %v204, %v220
        %v223 = vrcp.pop %v213
        %v224 = vmul.f32 %v213, %v223
        %v225 = vsub.f32 1.0, %v224
        %v226 = vmul.f32 %v223, %v225
        %v227 = vadd.f32 %v223, %v226
        %vm228 = vweird.f32 %v213
        %vm229 = vweird.f32 %v223
        %vm230 = vmor %vm228, %vm229
        %v231 = vsel %vm230, %v223, %v227
        %v232 = vand.u32 2147483647, %v213
        %vm233 = vcmp.eq.f32.partialorder %v232, 8.507059e+37
        %v234 = vand.u32 %v213, 2147483648
        %v235 = vor.u32 1.1754944e-38, %v234
        %v236 = vsel %vm233, %v235, %v231
        %v237 = vrcp.pop %v216
        %v238 = vmul.f32 %v216, %v237
        %v239 = vsub.f32 1.0, %v238
        %v240 = vmul.f32 %v237, %v239
        %v241 = vadd.f32 %v237, %v240
        %vm242 = vweird.f32 %v216
        %vm243 = vweird.f32 %v237
        %vm244 = vmor %vm242, %vm243
        %v245 = vsel %vm244, %v237, %v241
        %v246 = vand.u32 2147483647, %v216
        %vm247 = vcmp.eq.f32.partialorder %v246, 8.507059e+37
        %v248 = vand.u32 %v216, 2147483648
        %v249 = vor.u32 1.1754944e-38, %v248
        %v250 = vsel %vm247, %v249, %v245
        %v251 = vmul.f32 %v208, %v236
        %v252 = vmul.f32 %v210, %v250
        %vm253 = vcmp.gt.f32.partialorder %v251, 0.0
        %vm254 = vcmp.gt.f32.partialorder %v252, 0.0
        %v255 = vsub.f32 %v172, %v168
        %v256 = vsub.f32 %v173, %v169
        %v257 = vmul.f32 %v251, %v255
        %v258 = vmul.f32 %v252, %v256
        %v259 = vsel %vm253, %v257, 0.0
        %v260 = vsel %vm254, %v258, 0.0
        %v261 = vsel %vm174, %v259, 0.0
        %262 = vadd.xlane.f32.xlu0 %v261
        %v263 = vpop.xlane.xlu0 %262
        %v264 = vsel %vm174, %v260, 0.0
        %265 = vadd.xlane.f32.xlu0 %v264
        %v266 = vpop.xlane.xlu0 %265
        %v267 = vsub.f32 %v197, %v221
        %v268 = vsub.f32 %v198, %v222
        %v269 = vadd.f32 %v263, %v267
        %v270 = vadd.f32 %v266, %v268
        %s271 = smul.u32 %s16, 16
        %v272 = vlaneseq
        %v273 = vshrl.u32 %v272, 7
        %v274 = vadd.s32 %v273, 8
        %v275 = vstv %s271
        %v276 = vadd.s32 %v275, %v273
        %v277 = vadd.s32 %v275, %v274
        %vm278 = vcmp.lt.s32.totalorder %v276, 64
        %vm279 = vcmp.lt.s32.totalorder %v277, 64
        %v280 = vsel %vm278, %v269, 0.0
        %v281 = vsel %vm279, %v270, 0.0
        %vm282 = vcmask 7168
        %v283 = vsel %vm282, %v280, 0.0
        %v284 = vsel %vm282, %v281, 0.0
        %v285 = vadd.f32 %v283, %v284
        %286 = vadd.xlane.f32.xlu0 %v285
        %v287 = vpop.xlane.xlu0 %286
        %v288 = vrot.slane %v287, 4
        %v289 = vadd.f32 %v287, %v288
        %v290 = vrot.slane %v289, 2
        %v291 = vadd.f32 %v289, %v290
        %v292 = vrot.slane %v291, 1
        %v293 = vadd.f32 %v291, %v292
        %s294 = vtos %v293
        %v295 = vstv %s294
        %296 = vst [vmem:[%s153] sm:$0xff] %v295
        %s297 = sand.u32 %s76, 1
        %s298 = scalar_lea.sflag [#allocation3], %s297
        %s299 = sand.u32 %s76, 1
        %s300 = smul.addr %s299, 8
        %s301 = scalar_lea.vmem [#allocation2], %s300
        // Predicated region
        $region29: #{tpu_custom_call.1} parent=27 // pred_check
          %p302 = pneg %p86
        $region30: #{tpu_custom_call.1} parent=27 // pred_check_branch
          %304 = sbr.rel (%p302) target = $region32
        $region31: #{tpu_custom_call.1} parent=27 // pred_region
          %306 = vsyncadd %s298, 0
          %s307 = smul.addr %s16, 8
          %s308 = scalar_lea.hbm %s2, %s307
          %s310 = sshll.u32 %s301, 4
          %s311 = int_to_ptr.vmem [resolvable:$true] %s310
          %s312 = sshll.u32 %s308, 4
          %s313 = int_to_ptr.hbm [resolvable:$true] %s312
          %315 = dma.vmem_to_hbm [thread:$0]  %s311, 128, %s313, %s298
        $region32: #{tpu_custom_call.1} parent=27 // pred_fallthru
          _
      $region28: #{tpu_custom_call.1} parent=5 // pred_fallthru
        _
      %p316 = scmp.le.s32.totalorder 2, %s11
      // Predicated region
      $region33: #{tpu_custom_call.1} parent=5 // pred_check
        %p317 = pneg %p316
      $region34: #{tpu_custom_call.1} parent=5 // pred_check_branch
        %319 = sbr.rel (%p317) target = $region36
      $region35: #{tpu_custom_call.1} parent=5 // pred_region
        %s320 = ssub.s32 %s11, 2
        // Predicated region
        $region37: #{tpu_custom_call.1} parent=35 // pred_check
          %p321 = pneg %p92
        $region38: #{tpu_custom_call.1} parent=35 // pred_check_branch
          %323 = sbr.rel (%p321) target = $region40
        $region39: #{tpu_custom_call.1} parent=35 // pred_region
          %s324 = sand.u32 %s77, 1
          %s325 = scalar_lea.sflag [#allocation3], %s324
          %s326 = sand.u32 %s77, 1
          %s327 = smul.addr %s326, 8
          %s328 = scalar_lea.vmem [#allocation2], %s327
          %330 = dma.done %s325, 128
        $region40: #{tpu_custom_call.1} parent=35 // pred_fallthru
          _
      $region36: #{tpu_custom_call.1} parent=5 // pred_fallthru
        _
    $region6: #{tpu_custom_call.1} parent=1 // loop_footer
      %s15 = sadd.s32 1, %s11
    $region7: #{tpu_custom_call.1} parent=1 // loop_footer_branch
      %10 = sbr.rel target = $region3
    $region8: #{tpu_custom_call.1} parent=1 // loop_exit
      _
    %331 = vsyncpa [#allocation3], 1
    %s332 = scalar_lea.sflag [#allocation3], 1
    %333 = vsyncpa %s332, 1

</llo_original>
